<compile_context>
chip_gen: v7x
topology: tpu7x:2x2x1
jax: 0.10.0
libtpu: 0.0.40
codegen_flags: <defaults>
</compile_context>

<pallas_src>
import math
import functools

import jax
import jax.numpy as jnp
from jax import lax
from jax.experimental import pallas as pl
from jax.experimental.pallas import tpu as pltpu


# ----------------------------------------------------------------------------
# Kernel: one row-block of the fused Predictor forward + per-batch token mean.
# ----------------------------------------------------------------------------
def _mbt_kernel(layer_layout, bias_off, alpha_off, groups, group_size,
                x_ref, params_ref, out_ref):
    """layer_layout: tuple of (w_row_off, d_in, d_out) per layer (static ints).

    x_ref:      (TM, D)   activations for `groups` token-groups of `group_size` rows
    params_ref: (rows, W) packed slab (LN affine folded), resident across the grid
    out_ref:    (1, 1, groups) lane-dense per-batch predictions for this block
    """
    n_layers = len(layer_layout)
    h = x_ref[...].astype(jnp.float32)                       # (TM, D) f32 elementwise path

    for i, (w_off, d_in, d_out) in enumerate(layer_layout):
        # LayerNorm (eps=1e-5, biased variance, two-pass for numerical stability).
        # The affine (gamma, beta) is already folded into the Linear weights/bias.
        mu = jnp.mean(h, axis=-1, keepdims=True)
        c = h - mu
        var = jnp.mean(c * c, axis=-1, keepdims=True)
        hn = c * lax.rsqrt(var + 1e-5)

        if i < n_layers - 1:
            w = params_ref[w_off:w_off + d_in, 0:d_out]       # storage dtype (f32/bf16)
            b = params_ref[bias_off + i:bias_off + i + 1, 0:d_out].astype(jnp.float32)
            a = params_ref[alpha_off + i:alpha_off + i + 1, 0:d_out].astype(jnp.float32)
            # Linear (LN affine folded); bf16 operands feed the MXU's native path.
            h = jnp.dot(hn.astype(w.dtype), w,
                        preferred_element_type=jnp.float32) + b
            # PReLU (single shared alpha, read as a pre-broadcast VMEM row).
            h = jnp.where(h >= 0.0, h, a * h)
        else:
            # Tail fusion: the final Linear is affine, so average the N token rows
            # of each group FIRST (shrinks the degenerate d_out=1 projection from
            # TM rows to `groups` rows), then do the (groups, d_in) x (d_in,)
            # projection as a VPU multiply + lane reduce instead of a 1-lane MXU op.
            hg = jnp.mean(hn.reshape(groups, group_size, d_in), axis=1)   # (groups, d_in)
            wl = params_ref[w_off:w_off + 1, 0:d_in].astype(jnp.float32)  # (1, d_in) pre-transposed
            bl = params_ref[bias_off + i:bias_off + i + 1, 0:1].astype(jnp.float32)
            y = jnp.sum(hg * wl, axis=-1) + bl[0, 0]                      # (groups,)
            out_ref[...] = y.reshape(1, 1, groups)                        # lane-dense store


# ----------------------------------------------------------------------------
# Parameter construction (mirrors Predictor.__init__ / reset_parameters).
# ----------------------------------------------------------------------------
def make_params(feature_dim, seed=0):
    dims = [feature_dim, feature_dim, feature_dim // 2, feature_dim // 4,
            feature_dim // 8, feature_dim // 16, 1]
    key = jax.random.PRNGKey(seed)
    layers, alphas = [], []
    for i in range(6):
        d_in, d_out = dims[i], dims[i + 1]
        key, wk = jax.random.split(key)
        bound = math.sqrt(6.0 / (d_in + d_out))               # xavier_uniform_
        w = jax.random.uniform(wk, (d_out, d_in), jnp.float32, -bound, bound)
        layers.append(dict(
            gamma=jnp.ones((d_in,), jnp.float32),             # LayerNorm weight (default)
            beta=jnp.zeros((d_in,), jnp.float32),             # LayerNorm bias (default)
            w=w.T,                                            # store as (d_in, d_out)
            b=jnp.zeros((1, d_out), jnp.float32),             # Linear bias (filled 0.0)
        ))
        if i < 5:
            alphas.append(0.25)                               # nn.PReLU() default init
    return layers, jnp.asarray(alphas, jnp.float32)


# ----------------------------------------------------------------------------
# Build-time packing: fold LN affine into the Linear, pack everything into one slab.
# ----------------------------------------------------------------------------
def pack_params(layers, alphas, D, storage_dtype=jnp.float32):
    n_layers = len(layers)
    width = -(-D // 128) * 128                                # slab width = multiple of 128
    blocks, cur = [], 0

    def add_block(arr):                                       # 8-row-aligned static block
        nonlocal cur
        r, c = arr.shape
        r_pad = -(-r // 8) * 8
        blocks.append(jnp.pad(arr.astype(jnp.float32), ((0, r_pad - r), (0, width - c))))
        off = cur
        cur += r_pad
        return off

    layer_layout, fold_biases = [], []
    for i, lyr in enumerate(layers):
        gamma = lyr["gamma"].reshape(-1)
        beta = lyr["beta"].reshape(-1)
        w = lyr["w"]                                          # (d_in, d_out)
        b = lyr["b"].reshape(1, -1)                           # (1, d_out)
        d_in, d_out = w.shape
        w_fold = gamma[:, None] * w                           # fold LN scale
        b_fold = beta[None, :] @ w + b                        # fold LN shift
        # Last layer (d_out == 1): store the weight pre-transposed as a (1, d_in)
        # lane-major row for the in-kernel VPU multiply + lane reduce.
        w_store = w_fold.T if i == n_layers - 1 else w_fold
        layer_layout.append((add_block(w_store), d_in, d_out))
        fold_biases.append(b_fold)

    # One shared 8-row block for all 6 biases (row i = layer i).
    bias_mat = jnp.zeros((n_layers, width), jnp.float32)
    for i, bf in enumerate(fold_biases):
        bias_mat = bias_mat.at[i, :bf.shape[1]].set(bf[0])
    bias_off = add_block(bias_mat)

    # One shared 8-row block for the PReLU alphas, pre-broadcast across lanes.
    alpha_mat = jnp.broadcast_to(jnp.asarray(alphas, jnp.float32)[:, None],
                                 (n_layers - 1, width))
    alpha_off = add_block(alpha_mat)

    packed = jnp.concatenate(blocks, axis=0).astype(storage_dtype)
    return packed, tuple(layer_layout), bias_off, alpha_off


def _choose_groups_per_block(B, N, D, itemsize,
                             target_rows=1024, x_tile_budget=8 * 1024 * 1024):
    """TB = batches (token groups) per row block.

    Constraints: TB divides B (groups never straddle a block), TM = TB*N is
    8-row aligned whenever the grid has more than one step, and the
    double-buffered x tile stays within a conservative budget (sized so the
    whole working set fits v7x's 32 MiB scoped VMEM).  Prefer the largest tile
    up to ~target_rows rows (>=512-row tiles reach ~85% of HBM roofline).
    """
    cands = [tb for tb in range(1, B + 1)
             if B % tb == 0 and (tb == B or (tb * N) % 8 == 0)]
    fit = [tb for tb in cands if 2 * tb * N * D * itemsize <= x_tile_budget]
    pool = fit if fit else [min(cands)]
    under = [tb for tb in pool if tb * N <= target_rows]
    return max(under) if under else min(pool)


# ----------------------------------------------------------------------------
# Forward builder (packing hoisted out of the per-step forward).
# ----------------------------------------------------------------------------
def build_mbt_forward(layers, alphas, B, N, D, storage_dtype=jnp.float32):
    packed, layer_layout, bias_off, alpha_off = pack_params(layers, alphas, D, storage_dtype)
    M = B * N
    itemsize = jnp.zeros((), storage_dtype).dtype.itemsize
    TB = _choose_groups_per_block(B, N, D, itemsize)          # batches per row block
    TM = TB * N                                               # token rows per block
    G = B // TB                                               # grid steps
    assert G * TM == M

    kernel = functools.partial(_mbt_kernel, layer_layout, bias_off, alpha_off, TB, N)

    call = pl.pallas_call(
        kernel,
        out_shape=jax.ShapeDtypeStruct((G, 1, TB), jnp.float32),
        grid=(G,),
        in_specs=[
            pl.BlockSpec((TM, D), lambda i: (i, 0)),          # x row block (double-buffered)
            pl.BlockSpec(packed.shape, lambda i: (0, 0)),     # param slab: constant -> resident
        ],
        out_specs=pl.BlockSpec((1, 1, TB), lambda i: (i, 0, 0)),
        compiler_params=pltpu.CompilerParams(
            dimension_semantics=("parallel",),                # v7x: shard row blocks over 2 TCs
            vmem_limit_bytes=32 * 1024 * 1024,
        ),
    )

    @jax.jit
    def forward(features):
        x = features.reshape(M, D).astype(storage_dtype)
        out = call(x, packed)                                 # (G, 1, TB) lane-dense
        return out.reshape(B, 1)
    return forward


# ----------------------------------------------------------------------------
# Pure-JAX reference (mirrors the PyTorch module).  `storage_dtype` reproduces the
# kernel's operand rounding so the bf16 path can be checked to tight tolerance.
# ----------------------------------------------------------------------------
def mbt_reference(features, layers, alphas, storage_dtype=jnp.float32):
    B, N, D = features.shape
    q = lambda a: a.astype(storage_dtype).astype(jnp.float32)
    h = q(features.reshape(B * N, D))
    n = len(layers)
    for i, lyr in enumerate(layers):
        mu = jnp.mean(h, axis=-1, keepdims=True)
        var = jnp.mean((h - mu) ** 2, axis=-1, keepdims=True)
        hn = (h - mu) / jnp.sqrt(var + 1e-5) * lyr["gamma"].reshape(-1) + lyr["beta"].reshape(-1)
        w = q(lyr["w"])
        b = lyr["b"].reshape(1, -1)
        if i < n - 1:
            h = q(hn) @ w + b
            h = jnp.where(h >= 0, h, alphas[i] * h)
        else:
            h = hn @ w + b                                    # tail is f32 VPU math in the kernel
    return h.reshape(B, N, 1).mean(axis=1)                    # (B, 1)


if __name__ == "__main__":
    B, N, D = 2, 8, 32                                        # batch (DARTS candidates), tokens, feature_dim
    key = jax.random.PRNGKey(0)
    features = jax.random.normal(key, (B, N, D), jnp.float32)
    layers, alphas = make_params(D, seed=0)

    ref = mbt_reference(features, layers, alphas)

    # f32 storage path: exact check against the PyTorch-faithful reference.
    fwd_f32 = build_mbt_forward(layers, alphas, B, N, D, storage_dtype=jnp.float32)
    out_f32 = jax.block_until_ready(fwd_f32(features))
    assert out_f32.shape == (B, 1), out_f32.shape
    assert jnp.allclose(out_f32, ref, atol=1e-4, rtol=1e-4), (out_f32, ref)

    # bf16 storage path (halved HBM traffic, native MXU bf16): checked against a
    # reference that applies the same operand rounding.
    fwd_bf16 = build_mbt_forward(layers, alphas, B, N, D, storage_dtype=jnp.bfloat16)
    out_bf16 = jax.block_until_ready(fwd_bf16(features))
    ref_bf16 = mbt_reference(features, layers, alphas, storage_dtype=jnp.bfloat16)
    assert out_bf16.shape == (B, 1), out_bf16.shape
    assert jnp.allclose(out_bf16, ref_bf16, atol=5e-3, rtol=5e-3), (out_bf16, ref_bf16)

    print("KERNEL_OK")
</pallas_src>

<mosaic_0001>
module attributes {stable_mosaic.version = 11 : i64} {
  func.func @_mbt_kernel(%arg0: i32, %arg1: memref<16x32xf32, #tpu.memory_space<vmem>>, %arg2: memref<120x128xf32, #tpu.memory_space<vmem>>, %arg3: memref<1x1x2xf32, #tpu.memory_space<vmem>>) attributes {dimension_semantics = [#tpu.dimension_semantics<parallel>], iteration_bounds = array<i64: 1>, scalar_prefetch = 0 : i64, scratch_operands = 0 : i64, tpu.core_type = #tpu.core_type<tc>, window_params = [{transform_indices = @transform_0, window_bounds = array<i64: 16, 32>}, {pipeline_mode = #tpu.pipeline_mode<synchronous>, transform_indices = @transform_1, window_bounds = array<i64: 120, 128>}, {transform_indices = @transform_2, window_bounds = array<i64: 1, 1, 2>}]} {
    %c0 = arith.constant 0 : index
    %c0_0 = arith.constant 0 : index
    %0 = vector.load %arg1[%c0, %c0_0] : memref<16x32xf32, #tpu.memory_space<vmem>>, vector<16x32xf32>
    %cst = arith.constant dense<0.000000e+00> : vector<16xf32>
    %1 = vector.multi_reduction <add>, %0, %cst [1] : vector<16x32xf32> to vector<16xf32>
    %2 = vector.shape_cast %1 : vector<16xf32> to vector<16x1xf32>
    %cst_1 = arith.constant 3.200000e+01 : f32
    %3 = vector.broadcast %cst_1 : f32 to vector<16x1xf32>
    %4 = arith.divf %2, %3 : vector<16x1xf32>
    %5 = vector.broadcast %4 : vector<16x1xf32> to vector<16x32xf32>
    %6 = arith.subf %0, %5 : vector<16x32xf32>
    %7 = arith.mulf %6, %6 : vector<16x32xf32>
    %cst_2 = arith.constant dense<0.000000e+00> : vector<16xf32>
    %8 = vector.multi_reduction <add>, %7, %cst_2 [1] : vector<16x32xf32> to vector<16xf32>
    %9 = vector.shape_cast %8 : vector<16xf32> to vector<16x1xf32>
    %cst_3 = arith.constant 3.200000e+01 : f32
    %10 = vector.broadcast %cst_3 : f32 to vector<16x1xf32>
    %11 = arith.divf %9, %10 : vector<16x1xf32>
    %cst_4 = arith.constant 9.99999974E-6 : f32
    %12 = vector.broadcast %cst_4 : f32 to vector<16x1xf32>
    %13 = arith.addf %11, %12 : vector<16x1xf32>
    %14 = math.rsqrt %13 : vector<16x1xf32>
    %15 = vector.broadcast %14 : vector<16x1xf32> to vector<16x32xf32>
    %16 = arith.mulf %6, %15 : vector<16x32xf32>
    %c0_5 = arith.constant 0 : index
    %c0_6 = arith.constant 0 : index
    %17 = vector.load %arg2[%c0_5, %c0_6] : memref<120x128xf32, #tpu.memory_space<vmem>>, vector<32x32xf32>
    %c104 = arith.constant 104 : index
    %c0_7 = arith.constant 0 : index
    %18 = vector.load %arg2[%c104, %c0_7] : memref<120x128xf32, #tpu.memory_space<vmem>>, vector<1x32xf32>
    %c112 = arith.constant 112 : index
    %c0_8 = arith.constant 0 : index
    %19 = vector.load %arg2[%c112, %c0_8] : memref<120x128xf32, #tpu.memory_space<vmem>>, vector<1x32xf32>
    %cst_9 = arith.constant dense<0.000000e+00> : vector<16x32xf32>
    %20 = tpu.matmul %16, %17, %cst_9 {dimension_numbers = #tpu.dot_dimension_numbers<[1], [0], [0], [1], [0, 0, 1, 1], [], []>} : vector<16x32xf32>, vector<32x32xf32>, vector<16x32xf32> -> vector<16x32xf32>
    %21 = vector.broadcast %18 : vector<1x32xf32> to vector<16x32xf32>
    %22 = arith.addf %20, %21 : vector<16x32xf32>
    %cst_10 = arith.constant 0.000000e+00 : f32
    %23 = vector.broadcast %cst_10 : f32 to vector<16x32xf32>
    %24 = arith.cmpf oge, %22, %23 : vector<16x32xf32>
    %25 = vector.broadcast %19 : vector<1x32xf32> to vector<16x32xf32>
    %26 = arith.mulf %25, %22 : vector<16x32xf32>
    %27 = arith.select %24, %22, %26 : vector<16x32xi1>, vector<16x32xf32>
    %cst_11 = arith.constant dense<0.000000e+00> : vector<16xf32>
    %28 = vector.multi_reduction <add>, %27, %cst_11 [1] : vector<16x32xf32> to vector<16xf32>
    %29 = vector.shape_cast %28 : vector<16xf32> to vector<16x1xf32>
    %cst_12 = arith.constant 3.200000e+01 : f32
    %30 = vector.broadcast %cst_12 : f32 to vector<16x1xf32>
    %31 = arith.divf %29, %30 : vector<16x1xf32>
    %32 = vector.broadcast %31 : vector<16x1xf32> to vector<16x32xf32>
    %33 = arith.subf %27, %32 : vector<16x32xf32>
    %34 = arith.mulf %33, %33 : vector<16x32xf32>
    %cst_13 = arith.constant dense<0.000000e+00> : vector<16xf32>
    %35 = vector.multi_reduction <add>, %34, %cst_13 [1] : vector<16x32xf32> to vector<16xf32>
    %36 = vector.shape_cast %35 : vector<16xf32> to vector<16x1xf32>
    %cst_14 = arith.constant 3.200000e+01 : f32
    %37 = vector.broadcast %cst_14 : f32 to vector<16x1xf32>
    %38 = arith.divf %36, %37 : vector<16x1xf32>
    %cst_15 = arith.constant 9.99999974E-6 : f32
    %39 = vector.broadcast %cst_15 : f32 to vector<16x1xf32>
    %40 = arith.addf %38, %39 : vector<16x1xf32>
    %41 = math.rsqrt %40 : vector<16x1xf32>
    %42 = vector.broadcast %41 : vector<16x1xf32> to vector<16x32xf32>
    %43 = arith.mulf %33, %42 : vector<16x32xf32>
    %c32 = arith.constant 32 : index
    %c0_16 = arith.constant 0 : index
    %44 = vector.load %arg2[%c32, %c0_16] : memref<120x128xf32, #tpu.memory_space<vmem>>, vector<32x16xf32>
    %c105 = arith.constant 105 : index
    %c0_17 = arith.constant 0 : index
    %45 = vector.load %arg2[%c105, %c0_17] : memref<120x128xf32, #tpu.memory_space<vmem>>, vector<1x16xf32>
    %c113 = arith.constant 113 : index
    %c0_18 = arith.constant 0 : index
    %46 = vector.load %arg2[%c113, %c0_18] : memref<120x128xf32, #tpu.memory_space<vmem>>, vector<1x16xf32>
    %cst_19 = arith.constant dense<0.000000e+00> : vector<16x16xf32>
    %47 = tpu.matmul %43, %44, %cst_19 {dimension_numbers = #tpu.dot_dimension_numbers<[1], [0], [0], [1], [0, 0, 1, 1], [], []>} : vector<16x32xf32>, vector<32x16xf32>, vector<16x16xf32> -> vector<16x16xf32>
    %48 = vector.broadcast %45 : vector<1x16xf32> to vector<16x16xf32>
    %49 = arith.addf %47, %48 : vector<16x16xf32>
    %cst_20 = arith.constant 0.000000e+00 : f32
    %50 = vector.broadcast %cst_20 : f32 to vector<16x16xf32>
    %51 = arith.cmpf oge, %49, %50 : vector<16x16xf32>
    %52 = vector.broadcast %46 : vector<1x16xf32> to vector<16x16xf32>
    %53 = arith.mulf %52, %49 : vector<16x16xf32>
    %54 = arith.select %51, %49, %53 : vector<16x16xi1>, vector<16x16xf32>
    %cst_21 = arith.constant dense<0.000000e+00> : vector<16xf32>
    %55 = vector.multi_reduction <add>, %54, %cst_21 [1] : vector<16x16xf32> to vector<16xf32>
    %56 = vector.shape_cast %55 : vector<16xf32> to vector<16x1xf32>
    %cst_22 = arith.constant 1.600000e+01 : f32
    %57 = vector.broadcast %cst_22 : f32 to vector<16x1xf32>
    %58 = arith.divf %56, %57 : vector<16x1xf32>
    %59 = vector.broadcast %58 : vector<16x1xf32> to vector<16x16xf32>
    %60 = arith.subf %54, %59 : vector<16x16xf32>
    %61 = arith.mulf %60, %60 : vector<16x16xf32>
    %cst_23 = arith.constant dense<0.000000e+00> : vector<16xf32>
    %62 = vector.multi_reduction <add>, %61, %cst_23 [1] : vector<16x16xf32> to vector<16xf32>
    %63 = vector.shape_cast %62 : vector<16xf32> to vector<16x1xf32>
    %cst_24 = arith.constant 1.600000e+01 : f32
    %64 = vector.broadcast %cst_24 : f32 to vector<16x1xf32>
    %65 = arith.divf %63, %64 : vector<16x1xf32>
    %cst_25 = arith.constant 9.99999974E-6 : f32
    %66 = vector.broadcast %cst_25 : f32 to vector<16x1xf32>
    %67 = arith.addf %65, %66 : vector<16x1xf32>
    %68 = math.rsqrt %67 : vector<16x1xf32>
    %69 = vector.broadcast %68 : vector<16x1xf32> to vector<16x16xf32>
    %70 = arith.mulf %60, %69 : vector<16x16xf32>
    %c64 = arith.constant 64 : index
    %c0_26 = arith.constant 0 : index
    %71 = vector.load %arg2[%c64, %c0_26] : memref<120x128xf32, #tpu.memory_space<vmem>>, vector<16x8xf32>
    %c106 = arith.constant 106 : index
    %c0_27 = arith.constant 0 : index
    %72 = vector.load %arg2[%c106, %c0_27] : memref<120x128xf32, #tpu.memory_space<vmem>>, vector<1x8xf32>
    %c114 = arith.constant 114 : index
    %c0_28 = arith.constant 0 : index
    %73 = vector.load %arg2[%c114, %c0_28] : memref<120x128xf32, #tpu.memory_space<vmem>>, vector<1x8xf32>
    %cst_29 = arith.constant dense<0.000000e+00> : vector<16x8xf32>
    %74 = tpu.matmul %70, %71, %cst_29 {dimension_numbers = #tpu.dot_dimension_numbers<[1], [0], [0], [1], [0, 0, 1, 1], [], []>} : vector<16x16xf32>, vector<16x8xf32>, vector<16x8xf32> -> vector<16x8xf32>
    %75 = vector.broadcast %72 : vector<1x8xf32> to vector<16x8xf32>
    %76 = arith.addf %74, %75 : vector<16x8xf32>
    %cst_30 = arith.constant 0.000000e+00 : f32
    %77 = vector.broadcast %cst_30 : f32 to vector<16x8xf32>
    %78 = arith.cmpf oge, %76, %77 : vector<16x8xf32>
    %79 = vector.broadcast %73 : vector<1x8xf32> to vector<16x8xf32>
    %80 = arith.mulf %79, %76 : vector<16x8xf32>
    %81 = arith.select %78, %76, %80 : vector<16x8xi1>, vector<16x8xf32>
    %cst_31 = arith.constant dense<0.000000e+00> : vector<16xf32>
    %82 = vector.multi_reduction <add>, %81, %cst_31 [1] : vector<16x8xf32> to vector<16xf32>
    %83 = vector.shape_cast %82 : vector<16xf32> to vector<16x1xf32>
    %cst_32 = arith.constant 8.000000e+00 : f32
    %84 = vector.broadcast %cst_32 : f32 to vector<16x1xf32>
    %85 = arith.divf %83, %84 : vector<16x1xf32>
    %86 = vector.broadcast %85 : vector<16x1xf32> to vector<16x8xf32>
    %87 = arith.subf %81, %86 : vector<16x8xf32>
    %88 = arith.mulf %87, %87 : vector<16x8xf32>
    %cst_33 = arith.constant dense<0.000000e+00> : vector<16xf32>
    %89 = vector.multi_reduction <add>, %88, %cst_33 [1] : vector<16x8xf32> to vector<16xf32>
    %90 = vector.shape_cast %89 : vector<16xf32> to vector<16x1xf32>
    %cst_34 = arith.constant 8.000000e+00 : f32
    %91 = vector.broadcast %cst_34 : f32 to vector<16x1xf32>
    %92 = arith.divf %90, %91 : vector<16x1xf32>
    %cst_35 = arith.constant 9.99999974E-6 : f32
    %93 = vector.broadcast %cst_35 : f32 to vector<16x1xf32>
    %94 = arith.addf %92, %93 : vector<16x1xf32>
    %95 = math.rsqrt %94 : vector<16x1xf32>
    %96 = vector.broadcast %95 : vector<16x1xf32> to vector<16x8xf32>
    %97 = arith.mulf %87, %96 : vector<16x8xf32>
    %c80 = arith.constant 80 : index
    %c0_36 = arith.constant 0 : index
    %98 = vector.load %arg2[%c80, %c0_36] : memref<120x128xf32, #tpu.memory_space<vmem>>, vector<8x4xf32>
    %c107 = arith.constant 107 : index
    %c0_37 = arith.constant 0 : index
    %99 = vector.load %arg2[%c107, %c0_37] : memref<120x128xf32, #tpu.memory_space<vmem>>, vector<1x4xf32>
    %c115 = arith.constant 115 : index
    %c0_38 = arith.constant 0 : index
    %100 = vector.load %arg2[%c115, %c0_38] : memref<120x128xf32, #tpu.memory_space<vmem>>, vector<1x4xf32>
    %cst_39 = arith.constant dense<0.000000e+00> : vector<16x4xf32>
    %101 = tpu.matmul %97, %98, %cst_39 {dimension_numbers = #tpu.dot_dimension_numbers<[1], [0], [0], [1], [0, 0, 1, 1], [], []>} : vector<16x8xf32>, vector<8x4xf32>, vector<16x4xf32> -> vector<16x4xf32>
    %102 = vector.broadcast %99 : vector<1x4xf32> to vector<16x4xf32>
    %103 = arith.addf %101, %102 : vector<16x4xf32>
    %cst_40 = arith.constant 0.000000e+00 : f32
    %104 = vector.broadcast %cst_40 : f32 to vector<16x4xf32>
    %105 = arith.cmpf oge, %103, %104 : vector<16x4xf32>
    %106 = vector.broadcast %100 : vector<1x4xf32> to vector<16x4xf32>
    %107 = arith.mulf %106, %103 : vector<16x4xf32>
    %108 = arith.select %105, %103, %107 : vector<16x4xi1>, vector<16x4xf32>
    %cst_41 = arith.constant dense<0.000000e+00> : vector<16xf32>
    %109 = vector.multi_reduction <add>, %108, %cst_41 [1] : vector<16x4xf32> to vector<16xf32>
    %110 = vector.shape_cast %109 : vector<16xf32> to vector<16x1xf32>
    %cst_42 = arith.constant 4.000000e+00 : f32
    %111 = vector.broadcast %cst_42 : f32 to vector<16x1xf32>
    %112 = arith.divf %110, %111 : vector<16x1xf32>
    %113 = vector.broadcast %112 : vector<16x1xf32> to vector<16x4xf32>
    %114 = arith.subf %108, %113 : vector<16x4xf32>
    %115 = arith.mulf %114, %114 : vector<16x4xf32>
    %cst_43 = arith.constant dense<0.000000e+00> : vector<16xf32>
    %116 = vector.multi_reduction <add>, %115, %cst_43 [1] : vector<16x4xf32> to vector<16xf32>
    %117 = vector.shape_cast %116 : vector<16xf32> to vector<16x1xf32>
    %cst_44 = arith.constant 4.000000e+00 : f32
    %118 = vector.broadcast %cst_44 : f32 to vector<16x1xf32>
    %119 = arith.divf %117, %118 : vector<16x1xf32>
    %cst_45 = arith.constant 9.99999974E-6 : f32
    %120 = vector.broadcast %cst_45 : f32 to vector<16x1xf32>
    %121 = arith.addf %119, %120 : vector<16x1xf32>
    %122 = math.rsqrt %121 : vector<16x1xf32>
    %123 = vector.broadcast %122 : vector<16x1xf32> to vector<16x4xf32>
    %124 = arith.mulf %114, %123 : vector<16x4xf32>
    %c88 = arith.constant 88 : index
    %c0_46 = arith.constant 0 : index
    %125 = vector.load %arg2[%c88, %c0_46] : memref<120x128xf32, #tpu.memory_space<vmem>>, vector<4x2xf32>
    %c108 = arith.constant 108 : index
    %c0_47 = arith.constant 0 : index
    %126 = vector.load %arg2[%c108, %c0_47] : memref<120x128xf32, #tpu.memory_space<vmem>>, vector<1x2xf32>
    %c116 = arith.constant 116 : index
    %c0_48 = arith.constant 0 : index
    %127 = vector.load %arg2[%c116, %c0_48] : memref<120x128xf32, #tpu.memory_space<vmem>>, vector<1x2xf32>
    %cst_49 = arith.constant dense<0.000000e+00> : vector<16x2xf32>
    %128 = tpu.matmul %124, %125, %cst_49 {dimension_numbers = #tpu.dot_dimension_numbers<[1], [0], [0], [1], [0, 0, 1, 1], [], []>} : vector<16x4xf32>, vector<4x2xf32>, vector<16x2xf32> -> vector<16x2xf32>
    %129 = vector.broadcast %126 : vector<1x2xf32> to vector<16x2xf32>
    %130 = arith.addf %128, %129 : vector<16x2xf32>
    %cst_50 = arith.constant 0.000000e+00 : f32
    %131 = vector.broadcast %cst_50 : f32 to vector<16x2xf32>
    %132 = arith.cmpf oge, %130, %131 : vector<16x2xf32>
    %133 = vector.broadcast %127 : vector<1x2xf32> to vector<16x2xf32>
    %134 = arith.mulf %133, %130 : vector<16x2xf32>
    %135 = arith.select %132, %130, %134 : vector<16x2xi1>, vector<16x2xf32>
    %cst_51 = arith.constant dense<0.000000e+00> : vector<16xf32>
    %136 = vector.multi_reduction <add>, %135, %cst_51 [1] : vector<16x2xf32> to vector<16xf32>
    %137 = vector.shape_cast %136 : vector<16xf32> to vector<16x1xf32>
    %cst_52 = arith.constant 2.000000e+00 : f32
    %138 = vector.broadcast %cst_52 : f32 to vector<16x1xf32>
    %139 = arith.divf %137, %138 : vector<16x1xf32>
    %140 = vector.broadcast %139 : vector<16x1xf32> to vector<16x2xf32>
    %141 = arith.subf %135, %140 : vector<16x2xf32>
    %142 = arith.mulf %141, %141 : vector<16x2xf32>
    %cst_53 = arith.constant dense<0.000000e+00> : vector<16xf32>
    %143 = vector.multi_reduction <add>, %142, %cst_53 [1] : vector<16x2xf32> to vector<16xf32>
    %144 = vector.shape_cast %143 : vector<16xf32> to vector<16x1xf32>
    %cst_54 = arith.constant 2.000000e+00 : f32
    %145 = vector.broadcast %cst_54 : f32 to vector<16x1xf32>
    %146 = arith.divf %144, %145 : vector<16x1xf32>
    %cst_55 = arith.constant 9.99999974E-6 : f32
    %147 = vector.broadcast %cst_55 : f32 to vector<16x1xf32>
    %148 = arith.addf %146, %147 : vector<16x1xf32>
    %149 = math.rsqrt %148 : vector<16x1xf32>
    %150 = vector.broadcast %149 : vector<16x1xf32> to vector<16x2xf32>
    %151 = arith.mulf %141, %150 : vector<16x2xf32>
    %152 = vector.shape_cast %151 : vector<16x2xf32> to vector<2x8x2xf32>
    %cst_56 = arith.constant dense<0.000000e+00> : vector<2x2xf32>
    %153 = vector.multi_reduction <add>, %152, %cst_56 [1] : vector<2x8x2xf32> to vector<2x2xf32>
    %cst_57 = arith.constant 8.000000e+00 : f32
    %154 = vector.broadcast %cst_57 : f32 to vector<2x2xf32>
    %155 = arith.divf %153, %154 : vector<2x2xf32>
    %c96 = arith.constant 96 : index
    %c0_58 = arith.constant 0 : index
    %156 = vector.load %arg2[%c96, %c0_58] : memref<120x128xf32, #tpu.memory_space<vmem>>, vector<1x2xf32>
    %c109 = arith.constant 109 : index
    %c0_59 = arith.constant 0 : index
    %157 = vector.load %arg2[%c109, %c0_59] : memref<120x128xf32, #tpu.memory_space<vmem>>, vector<1x1xf32>
    %158 = vector.broadcast %156 : vector<1x2xf32> to vector<2x2xf32>
    %159 = arith.mulf %155, %158 : vector<2x2xf32>
    %cst_60 = arith.constant dense<0.000000e+00> : vector<2xf32>
    %160 = vector.multi_reduction <add>, %159, %cst_60 [1] : vector<2x2xf32> to vector<2xf32>
    %161 = vector.extract %157[0, 0] : f32 from vector<1x1xf32>
    %162 = vector.broadcast %161 : f32 to vector<2xf32>
    %163 = arith.addf %160, %162 : vector<2xf32>
    %164 = vector.shape_cast %163 : vector<2xf32> to vector<1x1x2xf32>
    %c0_61 = arith.constant 0 : index
    %c0_62 = arith.constant 0 : index
    %c0_63 = arith.constant 0 : index
    %165 = vector.load %arg3[%c0_61, %c0_62, %c0_63] : memref<1x1x2xf32, #tpu.memory_space<vmem>>, vector<1x1x2xf32>
    tpu.vector_store %arg3[%c0_61, %c0_62, %c0_63], %164 {strides = array<i32>} : memref<1x1x2xf32, #tpu.memory_space<vmem>>, vector<1x1x2xf32>,
    return
  }
  func.func @transform_0(%arg0: i32) -> (i32, i32) {
    %c0_i32 = arith.constant 0 : i32
    %c0_i32_0 = arith.constant 0 : i32
    return %arg0, %c0_i32 : i32, i32
  }
  func.func @transform_1(%arg0: i32) -> (i32, i32) {
    %c0_i32 = arith.constant 0 : i32
    %c0_i32_0 = arith.constant 0 : i32
    %c0_i32_1 = arith.constant 0 : i32
    return %c0_i32, %c0_i32_0 : i32, i32
  }
  func.func @transform_2(%arg0: i32) -> (i32, i32, i32) {
    %c0_i32 = arith.constant 0 : i32
    %c0_i32_0 = arith.constant 0 : i32
    %c0_i32_1 = arith.constant 0 : i32
    return %arg0, %c0_i32, %c0_i32_0 : i32, i32, i32
  }
}

</mosaic_0001>

<llo_original>
// kernel: forward.1
$region0: #{forward.1}
  #allocation0 [shape = 'u32[]', space=smem, size = 0x4, offset = 0x4, fixed_abs, tag = 'smem constant byte address 0x4 - core index']
  #allocation1 [shape = 'u32[144,128]{1,0:T(1,128)}', space=vmem, size = 0x12000, scoped, tag = 'internal scratch']
  %s0 = inlined_call_operand.hbm [shape: f32[16,32], index: 0, kind: input, shape index: {}]
  %s1 = inlined_call_operand.hbm [shape: f32[120,128], index: 1, kind: input, shape index: {}]
  %s2 = inlined_call_operand.hbm [shape: f32[1,1,2], index: 2, kind: output, shape index: {}]
  %s3 = sld [smem:[#allocation0]]
  $region26: #{forward.1} parent=0
    _
  %s5 = ssub.s32 1, %s3
  %s6 = scalar_select 0, %s5, %s3
  $region1: #{forward.1} parent=0
    #allocation2 [shape = 'u8[8192]{0}', space=vmem, size = 0x2000, scoped, tag = 'input window, operand 0, single buffered']
    #allocation3 [shape = 's32[1]{0}', space=sflag, size = 0x4, scoped, tag = 'scoped memory for forward.1']
    #allocation4 [shape = 's32[1]{0}', space=sflag, size = 0x4, scoped, tag = 'scoped memory for forward.1']
    #allocation5 [shape = 'u8[61440]{0}', space=vmem, size = 0xf000, scoped, tag = 'input window, operand 1, single buffered']
    #allocation6 [shape = 's32[1]{0}', space=sflag, size = 0x4, scoped, tag = 'scoped memory for forward.1']
    #allocation7 [shape = 'u8[512]{0}', space=vmem, size = 0x400, scoped, tag = 'output window, operand 0, single buffered']
    %7 = vsyncpa [#allocation3], 0
    %8 = vsyncpa [#allocation6], 0
    %9 = vsyncpa [#allocation4], 0
    // Predicated region
    $region2: #{forward.1} parent=1 // pred_check
      _
    $region3: #{forward.1} parent=1 // pred_check_branch
      %11 = sbr.rel (0) target = $region5
    $region4: #{forward.1} parent=1 // pred_region
      %s13 = ssub.s32 256, 256
      %14 = vsyncadd [#allocation3], %s13
      %s15 = sshll.u32 [#allocation2], 4
      %s16 = int_to_ptr.vmem [resolvable:$true] %s15
      %21 = dma.hbm_to_vmem [thread:$0]  %s0, 256, %s16, [#allocation3], 128, 128, 8
    $region5: #{forward.1} parent=1 // pred_fallthru
      _
    // Predicated region
    $region6: #{forward.1} parent=1 // pred_check
      _
    $region7: #{forward.1} parent=1 // pred_check_branch
      %23 = sbr.rel (0) target = $region9
    $region8: #{forward.1} parent=1 // pred_region
      %s25 = ssub.s32 1920, 1920
      %26 = vsyncadd [#allocation6], %s25
      %s27 = sshll.u32 [#allocation5], 4
      %s28 = int_to_ptr.vmem [resolvable:$true] %s27
      %33 = dma.hbm_to_vmem [thread:$0]  %s1, 1920, %s28, [#allocation6], 128, 128, 8
    $region9: #{forward.1} parent=1 // pred_fallthru
      _
    // Predicated region
    $region10: #{forward.1} parent=1 // pred_check
      _
    $region11: #{forward.1} parent=1 // pred_check_branch
      %35 = sbr.rel (0) target = $region13
    $region12: #{forward.1} parent=1 // pred_region
      %36 = dma.done [#allocation3], 256
    $region13: #{forward.1} parent=1 // pred_fallthru
      _
    // Predicated region
    $region14: #{forward.1} parent=1 // pred_check
      _
    $region15: #{forward.1} parent=1 // pred_check_branch
      %38 = sbr.rel (0) target = $region17
    $region16: #{forward.1} parent=1 // pred_region
      %39 = dma.done [#allocation6], 1920
    $region17: #{forward.1} parent=1 // pred_fallthru
      _
    %v40 = vld [vmem:[#allocation2] sm:$0xff]
    %v41 = vld [vmem:[#allocation2 + $0x8] sm:$0xff]
    %vm42 = vcmask 261120
    %v43 = vsel %vm42, %v40, 0.0
    %44 = vadd.xlane.f32.xlu0 %v43
    %v45 = vpop.xlane.xlu0 %44
    %v46 = vsel %vm42, %v41, 0.0
    %47 = vadd.xlane.f32.xlu0 %v46
    %v48 = vpop.xlane.xlu0 %47
    %v49 = vrcp.pop 32.0
    %v50 = vmul.f32 %v45, %v49
    %v51 = vmul.f32 %v48, %v49
    %v52 = vsub.f32 %v40, %v50
    %v53 = vsub.f32 %v41, %v51
    %v54 = vmul.f32 %v52, %v52
    %v55 = vmul.f32 %v53, %v53
    %v56 = vsel %vm42, %v54, 0.0
    %57 = vadd.xlane.f32.xlu0 %v56
    %v58 = vpop.xlane.xlu0 %57
    %v59 = vsel %vm42, %v55, 0.0
    %60 = vadd.xlane.f32.xlu0 %v59
    %v61 = vpop.xlane.xlu0 %60
    %v62 = vmul.f32 %v58, %v49
    %v63 = vmul.f32 %v61, %v49
    %v64 = vadd.f32 %v62, 1e-05
    %v65 = vadd.f32 %v63, 1e-05
    %v66 = vrsqrt.pop %v64
    %v67 = vrsqrt.pop %v65
    %v68 = vmul.f32 %v52, %v66
    %v69 = vmul.f32 %v53, %v67
    %v70 = vld [vmem:[#allocation5] sm:$0xff]
    %v71 = vld [vmem:[#allocation5 + $0x8] sm:$0xff]
    %v72 = vld [vmem:[#allocation5 + $0x10] sm:$0xff]
    %v73 = vld [vmem:[#allocation5 + $0x18] sm:$0xff]
    %v74 = vld [vmem:[#allocation5 + $0x68] sm:$0x1]
    %v75 = vld [vmem:[#allocation5 + $0x70] sm:$0x1]
    %v76 = vlaneseq
    %v77 = vshrl.u32 %v76, 7
    %v78 = vsub.s32 0, %v77
    %v79 = vrot.slane %v74, %v78
    %v81 = vsel %vm42, %v68, 0
    %v84 = vsel %vm42, %v69, 0
    %86 = vmatprep.subr.mxu0 0.0
    %87 = vmatpush1.msra.mxu0 %v70
    %88 = vmatprep.subr.mxu0 0.0
    %89 = vmatpush1.msra.mxu0 %v71
    %90 = vmatprep.subr.mxu0 0.0
    %91 = vmatpush1.msra.mxu0 %v72
    %92 = vmatprep.subr.mxu0 0.0
    %93 = vmatpush1.msra.mxu0 %v73
    %94 = vmatprep.subr.mxu0 0.0
    %95 = vmatpush1.msra.mxu0 0.0
    %96 = vmatprep.subr.mxu0 0.0
    %97 = vmatpush1.msra.mxu0 0.0
    %98 = vmatprep.subr.mxu0 0.0
    %99 = vmatpush1.msra.mxu0 0.0
    %100 = vmatprep.subr.mxu0 0.0
    %101 = vmatpush1.msra.mxu0 0.0
    %102 = vmatprep.subr.mxu0 0.0
    %103 = vmatpush1.msra.mxu0 0.0
    %104 = vmatprep.subr.mxu0 0.0
    %105 = vmatpush1.msra.mxu0 0.0
    %106 = vmatprep.subr.mxu0 0.0
    %107 = vmatpush1.msra.mxu0 0.0
    %108 = vmatprep.subr.mxu0 0.0
    %109 = vmatpush1.msra.mxu0 0.0
    %110 = vmatprep.subr.mxu0 0.0
    %111 = vmatpush1.msra.mxu0 0.0
    %112 = vmatprep.subr.mxu0 0.0
    %113 = vmatpush1.msra.mxu0 0.0
    %114 = vmatprep.subr.mxu0 0.0
    %115 = vmatpush1.msra.mxu0 0.0
    %116 = vmatprep.subr.mxu0 0.0
    %117 = vmatpush1.msra.mxu0 0.0
    %118 = vmatprep.subr.mxu0 0.0
    %119 = vmatpush1.msra.mxu0 0.0
    %120 = vmatprep.subr.mxu0 0.0
    %121 = vmatpush1.msra.mxu0 0.0
    %122 = vmatprep.subr.mxu0 0.0
    %123 = vmatpush1.msra.mxu0 0.0
    %124 = vmatprep.subr.mxu0 0.0
    %125 = vmatpush1.msra.mxu0 0.0
    %126 = vmatprep.subr.mxu0 0.0
    %127 = vmatpush1.msra.mxu0 0.0
    %128 = vmatprep.subr.mxu0 0.0
    %129 = vmatpush1.msra.mxu0 0.0
    %130 = vmatprep.subr.mxu0 0.0
    %131 = vmatpush1.msra.mxu0 0.0
    %132 = vmatprep.subr.mxu0 0.0
    %133 = vmatpush1.msra.mxu0 0.0
    %134 = vmatprep.subr.mxu0 0.0
    %135 = vmatpush1.msra.mxu0 0.0
    %136 = vmatprep.subr.mxu0 0.0
    %137 = vmatpush1.msra.mxu0 0.0
    %138 = vmatprep.subr.mxu0 0.0
    %139 = vmatpush1.msra.mxu0 0.0
    %140 = vmatprep.subr.mxu0 0.0
    %141 = vmatpush1.msra.mxu0 0.0
    %142 = vmatprep.subr.mxu0 0.0
    %143 = vmatpush1.msra.mxu0 0.0
    %144 = vmatprep.subr.mxu0 0.0
    %145 = vmatpush1.msra.mxu0 0.0
    %146 = vmatprep.subr.mxu0 0.0
    %147 = vmatpush1.msra.mxu0 0.0
    %148 = vmatprep.subr.mxu0 0.0
    %149 = vmatpush1.msra.mxu0 0.0
    %150 = vmatprep.mubr.f32.mxu0 0.0
    %151 = vmatmul.mubr.f32.gmra.mrb[0].mxu0 %v81
    %v152 = vpop.f32.mrb[0].mxu0
    %v153 = vadd.f32 %v79, %v152
    %v154 = vpop.f32.mrb[0].mxu0
    %155 = vmatprep.mubr.f32.mxu0 0.0
    %156 = vmatmul.mubr.f32.gmra.mrb[0].mxu0 %v84
    %v157 = vpop.f32.mrb[0].mxu0
    %v158 = vadd.f32 %v79, %v157
    %v159 = vpop.f32.mrb[0].mxu0
    %160 = vdwg.mxu0
    %vm161 = vcmp.ge.f32.partialorder %v153, 0.0
    %vm162 = vcmp.ge.f32.partialorder %v158, 0.0
    %v163 = vlaneseq
    %v164 = vshrl.u32 %v163, 7
    %v165 = vsub.s32 0, %v164
    %v166 = vrot.slane %v75, %v165
    %v167 = vmul.f32 %v166, %v153
    %v168 = vmul.f32 %v166, %v158
    %v169 = vsel %vm161, %v153, %v167
    %v170 = vsel %vm162, %v158, %v168
    %v171 = vsel %vm42, %v169, 0.0
    %172 = vadd.xlane.f32.xlu0 %v171
    %v173 = vpop.xlane.xlu0 %172
    %v174 = vsel %vm42, %v170, 0.0
    %175 = vadd.xlane.f32.xlu0 %v174
    %v176 = vpop.xlane.xlu0 %175
    %v177 = vmul.f32 %v173, %v49
    %v178 = vmul.f32 %v176, %v49
    %v179 = vsub.f32 %v169, %v177
    %v180 = vsub.f32 %v170, %v178
    %v181 = vmul.f32 %v179, %v179
    %v182 = vmul.f32 %v180, %v180
    %v183 = vsel %vm42, %v181, 0.0
    %184 = vadd.xlane.f32.xlu0 %v183
    %v185 = vpop.xlane.xlu0 %184
    %v186 = vsel %vm42, %v182, 0.0
    %187 = vadd.xlane.f32.xlu0 %v186
    %v188 = vpop.xlane.xlu0 %187
    %v189 = vmul.f32 %v185, %v49
    %v190 = vmul.f32 %v188, %v49
    %v191 = vadd.f32 %v189, 1e-05
    %v192 = vadd.f32 %v190, 1e-05
    %v193 = vrsqrt.pop %v191
    %v194 = vrsqrt.pop %v192
    %v195 = vmul.f32 %v179, %v193
    %v196 = vmul.f32 %v180, %v194
    %v197 = vld [vmem:[#allocation5 + $0x20] sm:$0xff]
    %v198 = vld [vmem:[#allocation5 + $0x28] sm:$0xff]
    %v199 = vld [vmem:[#allocation5 + $0x30] sm:$0xff]
    %v200 = vld [vmem:[#allocation5 + $0x38] sm:$0xff]
    %v201 = vld [vmem:[#allocation5 + $0x69] sm:$0x1]
    %v202 = vld [vmem:[#allocation5 + $0x71] sm:$0x1]
    %v203 = vlaneseq
    %v204 = vshrl.u32 %v203, 7
    %v205 = vsub.s32 0, %v204
    %v206 = vrot.slane %v201, %v205
    %v208 = vsel %vm42, %v195, 0
    %v211 = vsel %vm42, %v196, 0
    %213 = vmatprep.subr.mxu0 0.0
    %214 = vmatpush1.msra.mxu0 %v197
    %215 = vmatprep.subr.mxu0 0.0
    %216 = vmatpush1.msra.mxu0 %v198
    %217 = vmatprep.subr.mxu0 0.0
    %218 = vmatpush1.msra.mxu0 %v199
    %219 = vmatprep.subr.mxu0 0.0
    %220 = vmatpush1.msra.mxu0 %v200
    %221 = vmatprep.subr.mxu0 0.0
    %222 = vmatpush1.msra.mxu0 0.0
    %223 = vmatprep.subr.mxu0 0.0
    %224 = vmatpush1.msra.mxu0 0.0
    %225 = vmatprep.subr.mxu0 0.0
    %226 = vmatpush1.msra.mxu0 0.0
    %227 = vmatprep.subr.mxu0 0.0
    %228 = vmatpush1.msra.mxu0 0.0
    %229 = vmatprep.subr.mxu0 0.0
    %230 = vmatpush1.msra.mxu0 0.0
    %231 = vmatprep.subr.mxu0 0.0
    %232 = vmatpush1.msra.mxu0 0.0
    %233 = vmatprep.subr.mxu0 0.0
    %234 = vmatpush1.msra.mxu0 0.0
    %235 = vmatprep.subr.mxu0 0.0
    %236 = vmatpush1.msra.mxu0 0.0
    %237 = vmatprep.subr.mxu0 0.0
    %238 = vmatpush1.msra.mxu0 0.0
    %239 = vmatprep.subr.mxu0 0.0
    %240 = vmatpush1.msra.mxu0 0.0
    %241 = vmatprep.subr.mxu0 0.0
    %242 = vmatpush1.msra.mxu0 0.0
    %243 = vmatprep.subr.mxu0 0.0
    %244 = vmatpush1.msra.mxu0 0.0
    %245 = vmatprep.subr.mxu0 0.0
    %246 = vmatpush1.msra.mxu0 0.0
    %247 = vmatprep.subr.mxu0 0.0
    %248 = vmatpush1.msra.mxu0 0.0
    %249 = vmatprep.subr.mxu0 0.0
    %250 = vmatpush1.msra.mxu0 0.0
    %251 = vmatprep.subr.mxu0 0.0
    %252 = vmatpush1.msra.mxu0 0.0
    %253 = vmatprep.subr.mxu0 0.0
    %254 = vmatpush1.msra.mxu0 0.0
    %255 = vmatprep.subr.mxu0 0.0
    %256 = vmatpush1.msra.mxu0 0.0
    %257 = vmatprep.subr.mxu0 0.0
    %258 = vmatpush1.msra.mxu0 0.0
    %259 = vmatprep.subr.mxu0 0.0
    %260 = vmatpush1.msra.mxu0 0.0
    %261 = vmatprep.subr.mxu0 0.0
    %262 = vmatpush1.msra.mxu0 0.0
    %263 = vmatprep.subr.mxu0 0.0
    %264 = vmatpush1.msra.mxu0 0.0
    %265 = vmatprep.subr.mxu0 0.0
    %266 = vmatpush1.msra.mxu0 0.0
    %267 = vmatprep.subr.mxu0 0.0
    %268 = vmatpush1.msra.mxu0 0.0
    %269 = vmatprep.subr.mxu0 0.0
    %270 = vmatpush1.msra.mxu0 0.0
    %271 = vmatprep.subr.mxu0 0.0
    %272 = vmatpush1.msra.mxu0 0.0
    %273 = vmatprep.subr.mxu0 0.0
    %274 = vmatpush1.msra.mxu0 0.0
    %275 = vmatprep.subr.mxu0 0.0
    %276 = vmatpush1.msra.mxu0 0.0
    %277 = vmatprep.mubr.f32.mxu0 0.0
    %278 = vmatmul.mubr.f32.gmra.mrb[0].mxu0 %v208
    %v279 = vpop.f32.mrb[0].mxu0
    %v280 = vadd.f32 %v206, %v279
    %v281 = vpop.f32.mrb[0].mxu0
    %282 = vmatprep.mubr.f32.mxu0 0.0
    %283 = vmatmul.mubr.f32.gmra.mrb[0].mxu0 %v211
    %v284 = vpop.f32.mrb[0].mxu0
    %v285 = vadd.f32 %v206, %v284
    %v286 = vpop.f32.mrb[0].mxu0
    %287 = vdwg.mxu0
    %vm288 = vcmp.ge.f32.partialorder %v280, 0.0
    %vm289 = vcmp.ge.f32.partialorder %v285, 0.0
    %v290 = vlaneseq
    %v291 = vshrl.u32 %v290, 7
    %v292 = vsub.s32 0, %v291
    %v293 = vrot.slane %v202, %v292
    %v294 = vmul.f32 %v293, %v280
    %v295 = vmul.f32 %v293, %v285
    %v296 = vsel %vm288, %v280, %v294
    %v297 = vsel %vm289, %v285, %v295
    %vm298 = vcmask 130048
    %v299 = vsel %vm298, %v296, 0.0
    %300 = vadd.xlane.f32.xlu0 %v299
    %v301 = vpop.xlane.xlu0 %300
    %v302 = vsel %vm298, %v297, 0.0
    %303 = vadd.xlane.f32.xlu0 %v302
    %v304 = vpop.xlane.xlu0 %303
    %v305 = vrcp.pop 16.0
    %v306 = vmul.f32 %v301, %v305
    %v307 = vmul.f32 %v304, %v305
    %v308 = vsub.f32 %v296, %v306
    %v309 = vsub.f32 %v297, %v307
    %v310 = vmul.f32 %v308, %v308
    %v311 = vmul.f32 %v309, %v309
    %v312 = vsel %vm298, %v310, 0.0
    %313 = vadd.xlane.f32.xlu0 %v312
    %v314 = vpop.xlane.xlu0 %313
    %v315 = vsel %vm298, %v311, 0.0
    %316 = vadd.xlane.f32.xlu0 %v315
    %v317 = vpop.xlane.xlu0 %316
    %v318 = vmul.f32 %v314, %v305
    %v319 = vmul.f32 %v317, %v305
    %v320 = vadd.f32 %v318, 1e-05
    %v321 = vadd.f32 %v319, 1e-05
    %v322 = vrsqrt.pop %v320
    %v323 = vrsqrt.pop %v321
    %v324 = vmul.f32 %v308, %v322
    %v325 = vmul.f32 %v309, %v323
    %v326 = vld [vmem:[#allocation5 + $0x40] sm:$0xff]
    %v327 = vld [vmem:[#allocation5 + $0x48] sm:$0xff]
    %v328 = vld [vmem:[#allocation5 + $0x6a] sm:$0x1]
    %v329 = vld [vmem:[#allocation5 + $0x72] sm:$0x1]
    %v330 = vlaneseq
    %v331 = vshrl.u32 %v330, 7
    %v332 = vsub.s32 0, %v331
    %v333 = vrot.slane %v328, %v332
    %v335 = vsel %vm298, %v324, 0
    %v338 = vsel %vm298, %v325, 0
    %340 = vmatprep.subr.mxu0 0.0
    %341 = vmatpush1.msra.mxu0 %v326
    %342 = vmatprep.subr.mxu0 0.0
    %343 = vmatpush1.msra.mxu0 %v327
    %344 = vmatprep.subr.mxu0 0.0
    %345 = vmatpush1.msra.mxu0 0.0
    %346 = vmatprep.subr.mxu0 0.0
    %347 = vmatpush1.msra.mxu0 0.0
    %348 = vmatprep.subr.mxu0 0.0
    %349 = vmatpush1.msra.mxu0 0.0
    %350 = vmatprep.subr.mxu0 0.0
    %351 = vmatpush1.msra.mxu0 0.0
    %352 = vmatprep.subr.mxu0 0.0
    %353 = vmatpush1.msra.mxu0 0.0
    %354 = vmatprep.subr.mxu0 0.0
    %355 = vmatpush1.msra.mxu0 0.0
    %356 = vmatprep.subr.mxu0 0.0
    %357 = vmatpush1.msra.mxu0 0.0
    %358 = vmatprep.subr.mxu0 0.0
    %359 = vmatpush1.msra.mxu0 0.0
    %360 = vmatprep.subr.mxu0 0.0
    %361 = vmatpush1.msra.mxu0 0.0
    %362 = vmatprep.subr.mxu0 0.0
    %363 = vmatpush1.msra.mxu0 0.0
    %364 = vmatprep.subr.mxu0 0.0
    %365 = vmatpush1.msra.mxu0 0.0
    %366 = vmatprep.subr.mxu0 0.0
    %367 = vmatpush1.msra.mxu0 0.0
    %368 = vmatprep.subr.mxu0 0.0
    %369 = vmatpush1.msra.mxu0 0.0
    %370 = vmatprep.subr.mxu0 0.0
    %371 = vmatpush1.msra.mxu0 0.0
    %372 = vmatprep.subr.mxu0 0.0
    %373 = vmatpush1.msra.mxu0 0.0
    %374 = vmatprep.subr.mxu0 0.0
    %375 = vmatpush1.msra.mxu0 0.0
    %376 = vmatprep.subr.mxu0 0.0
    %377 = vmatpush1.msra.mxu0 0.0
    %378 = vmatprep.subr.mxu0 0.0
    %379 = vmatpush1.msra.mxu0 0.0
    %380 = vmatprep.subr.mxu0 0.0
    %381 = vmatpush1.msra.mxu0 0.0
    %382 = vmatprep.subr.mxu0 0.0
    %383 = vmatpush1.msra.mxu0 0.0
    %384 = vmatprep.subr.mxu0 0.0
    %385 = vmatpush1.msra.mxu0 0.0
    %386 = vmatprep.subr.mxu0 0.0
    %387 = vmatpush1.msra.mxu0 0.0
    %388 = vmatprep.subr.mxu0 0.0
    %389 = vmatpush1.msra.mxu0 0.0
    %390 = vmatprep.subr.mxu0 0.0
    %391 = vmatpush1.msra.mxu0 0.0
    %392 = vmatprep.subr.mxu0 0.0
    %393 = vmatpush1.msra.mxu0 0.0
    %394 = vmatprep.subr.mxu0 0.0
    %395 = vmatpush1.msra.mxu0 0.0
    %396 = vmatprep.subr.mxu0 0.0
    %397 = vmatpush1.msra.mxu0 0.0
    %398 = vmatprep.subr.mxu0 0.0
    %399 = vmatpush1.msra.mxu0 0.0
    %400 = vmatprep.subr.mxu0 0.0
    %401 = vmatpush1.msra.mxu0 0.0
    %402 = vmatprep.subr.mxu0 0.0
    %403 = vmatpush1.msra.mxu0 0.0
    %404 = vmatprep.mubr.f32.mxu0 0.0
    %405 = vmatmul.mubr.f32.gmra.mrb[0].mxu0 %v335
    %v406 = vpop.f32.mrb[0].mxu0
    %v407 = vadd.f32 %v333, %v406
    %v408 = vpop.f32.mrb[0].mxu0
    %409 = vmatprep.mubr.f32.mxu0 0.0
    %410 = vmatmul.mubr.f32.gmra.mrb[0].mxu0 %v338
    %v411 = vpop.f32.mrb[0].mxu0
    %v412 = vadd.f32 %v333, %v411
    %v413 = vpop.f32.mrb[0].mxu0
    %414 = vdwg.mxu0
    %vm415 = vcmp.ge.f32.partialorder %v407, 0.0
    %vm416 = vcmp.ge.f32.partialorder %v412, 0.0
    %v417 = vlaneseq
    %v418 = vshrl.u32 %v417, 7
    %v419 = vsub.s32 0, %v418
    %v420 = vrot.slane %v329, %v419
    %v421 = vmul.f32 %v420, %v407
    %v422 = vmul.f32 %v420, %v412
    %v423 = vsel %vm415, %v407, %v421
    %v424 = vsel %vm416, %v412, %v422
    %vm425 = vcmask 64512
    %v426 = vsel %vm425, %v423, 0.0
    %427 = vadd.xlane.f32.xlu0 %v426
    %v428 = vpop.xlane.xlu0 %427
    %v429 = vsel %vm425, %v424, 0.0
    %430 = vadd.xlane.f32.xlu0 %v429
    %v431 = vpop.xlane.xlu0 %430
    %v432 = vrcp.pop 8.0
    %v433 = vmul.f32 %v428, %v432
    %v434 = vmul.f32 %v431, %v432
    %v435 = vsub.f32 %v423, %v433
    %v436 = vsub.f32 %v424, %v434
    %v437 = vmul.f32 %v435, %v435
    %v438 = vmul.f32 %v436, %v436
    %v439 = vsel %vm425, %v437, 0.0
    %440 = vadd.xlane.f32.xlu0 %v439
    %v441 = vpop.xlane.xlu0 %440
    %v442 = vsel %vm425, %v438, 0.0
    %443 = vadd.xlane.f32.xlu0 %v442
    %v444 = vpop.xlane.xlu0 %443
    %v445 = vmul.f32 %v441, %v432
    %v446 = vmul.f32 %v444, %v432
    %v447 = vadd.f32 %v445, 1e-05
    %v448 = vadd.f32 %v446, 1e-05
    %v449 = vrsqrt.pop %v447
    %v450 = vrsqrt.pop %v448
    %v451 = vmul.f32 %v435, %v449
    %v452 = vmul.f32 %v436, %v450
    %v453 = vld [vmem:[#allocation5 + $0x50] sm:$0xff]
    %v454 = vld [vmem:[#allocation5 + $0x6b] sm:$0x1]
    %v455 = vld [vmem:[#allocation5 + $0x73] sm:$0x1]
    %v456 = vlaneseq
    %v457 = vshrl.u32 %v456, 7
    %v458 = vsub.s32 0, %v457
    %v459 = vrot.slane %v454, %v458
    %v461 = vsel %vm425, %v451, 0
    %v464 = vsel %vm425, %v452, 0
    %466 = vmatprep.subr.mxu0 0.0
    %467 = vmatpush1.msra.mxu0 %v453
    %468 = vmatprep.subr.mxu0 0.0
    %469 = vmatpush1.msra.mxu0 0.0
    %470 = vmatprep.subr.mxu0 0.0
    %471 = vmatpush1.msra.mxu0 0.0
    %472 = vmatprep.subr.mxu0 0.0
    %473 = vmatpush1.msra.mxu0 0.0
    %474 = vmatprep.subr.mxu0 0.0
    %475 = vmatpush1.msra.mxu0 0.0
    %476 = vmatprep.subr.mxu0 0.0
    %477 = vmatpush1.msra.mxu0 0.0
    %478 = vmatprep.subr.mxu0 0.0
    %479 = vmatpush1.msra.mxu0 0.0
    %480 = vmatprep.subr.mxu0 0.0
    %481 = vmatpush1.msra.mxu0 0.0
    %482 = vmatprep.subr.mxu0 0.0
    %483 = vmatpush1.msra.mxu0 0.0
    %484 = vmatprep.subr.mxu0 0.0
    %485 = vmatpush1.msra.mxu0 0.0
    %486 = vmatprep.subr.mxu0 0.0
    %487 = vmatpush1.msra.mxu0 0.0
    %488 = vmatprep.subr.mxu0 0.0
    %489 = vmatpush1.msra.mxu0 0.0
    %490 = vmatprep.subr.mxu0 0.0
    %491 = vmatpush1.msra.mxu0 0.0
    %492 = vmatprep.subr.mxu0 0.0
    %493 = vmatpush1.msra.mxu0 0.0
    %494 = vmatprep.subr.mxu0 0.0
    %495 = vmatpush1.msra.mxu0 0.0
    %496 = vmatprep.subr.mxu0 0.0
    %497 = vmatpush1.msra.mxu0 0.0
    %498 = vmatprep.subr.mxu0 0.0
    %499 = vmatpush1.msra.mxu0 0.0
    %500 = vmatprep.subr.mxu0 0.0
    %501 = vmatpush1.msra.mxu0 0.0
    %502 = vmatprep.subr.mxu0 0.0
    %503 = vmatpush1.msra.mxu0 0.0
    %504 = vmatprep.subr.mxu0 0.0
    %505 = vmatpush1.msra.mxu0 0.0
    %506 = vmatprep.subr.mxu0 0.0
    %507 = vmatpush1.msra.mxu0 0.0
    %508 = vmatprep.subr.mxu0 0.0
    %509 = vmatpush1.msra.mxu0 0.0
    %510 = vmatprep.subr.mxu0 0.0
    %511 = vmatpush1.msra.mxu0 0.0
    %512 = vmatprep.subr.mxu0 0.0
    %513 = vmatpush1.msra.mxu0 0.0
    %514 = vmatprep.subr.mxu0 0.0
    %515 = vmatpush1.msra.mxu0 0.0
    %516 = vmatprep.subr.mxu0 0.0
    %517 = vmatpush1.msra.mxu0 0.0
    %518 = vmatprep.subr.mxu0 0.0
    %519 = vmatpush1.msra.mxu0 0.0
    %520 = vmatprep.subr.mxu0 0.0
    %521 = vmatpush1.msra.mxu0 0.0
    %522 = vmatprep.subr.mxu0 0.0
    %523 = vmatpush1.msra.mxu0 0.0
    %524 = vmatprep.subr.mxu0 0.0
    %525 = vmatpush1.msra.mxu0 0.0
    %526 = vmatprep.subr.mxu0 0.0
    %527 = vmatpush1.msra.mxu0 0.0
    %528 = vmatprep.subr.mxu0 0.0
    %529 = vmatpush1.msra.mxu0 0.0
    %530 = vmatprep.mubr.f32.mxu0 0.0
    %531 = vmatmul.mubr.f32.gmra.mrb[0].mxu0 %v461
    %v532 = vpop.f32.mrb[0].mxu0
    %v533 = vadd.f32 %v459, %v532
    %v534 = vpop.f32.mrb[0].mxu0
    %535 = vmatprep.mubr.f32.mxu0 0.0
    %536 = vmatmul.mubr.f32.gmra.mrb[0].mxu0 %v464
    %v537 = vpop.f32.mrb[0].mxu0
    %v538 = vadd.f32 %v459, %v537
    %v539 = vpop.f32.mrb[0].mxu0
    %540 = vdwg.mxu0
    %vm541 = vcmp.ge.f32.partialorder %v533, 0.0
    %vm542 = vcmp.ge.f32.partialorder %v538, 0.0
    %v543 = vlaneseq
    %v544 = vshrl.u32 %v543, 7
    %v545 = vsub.s32 0, %v544
    %v546 = vrot.slane %v455, %v545
    %v547 = vmul.f32 %v546, %v533
    %v548 = vmul.f32 %v546, %v538
    %v549 = vsel %vm541, %v533, %v547
    %v550 = vsel %vm542, %v538, %v548
    %vm551 = vcmask 31744
    %v552 = vsel %vm551, %v549, 0.0
    %553 = vadd.xlane.f32.xlu0 %v552
    %v554 = vpop.xlane.xlu0 %553
    %v555 = vsel %vm551, %v550, 0.0
    %556 = vadd.xlane.f32.xlu0 %v555
    %v557 = vpop.xlane.xlu0 %556
    %v558 = vrcp.pop 4.0
    %v559 = vmul.f32 %v554, %v558
    %v560 = vmul.f32 %v557, %v558
    %v561 = vsub.f32 %v549, %v559
    %v562 = vsub.f32 %v550, %v560
    %v563 = vmul.f32 %v561, %v561
    %v564 = vmul.f32 %v562, %v562
    %v565 = vsel %vm551, %v563, 0.0
    %566 = vadd.xlane.f32.xlu0 %v565
    %v567 = vpop.xlane.xlu0 %566
    %v568 = vsel %vm551, %v564, 0.0
    %569 = vadd.xlane.f32.xlu0 %v568
    %v570 = vpop.xlane.xlu0 %569
    %v571 = vmul.f32 %v567, %v558
    %v572 = vmul.f32 %v570, %v558
    %v573 = vadd.f32 %v571, 1e-05
    %v574 = vadd.f32 %v572, 1e-05
    %v575 = vrsqrt.pop %v573
    %v576 = vrsqrt.pop %v574
    %v577 = vmul.f32 %v561, %v575
    %v578 = vmul.f32 %v562, %v576
    %v579 = vld [vmem:[#allocation5 + $0x58] sm:$0xf]
    %v580 = vld [vmem:[#allocation5 + $0x6c] sm:$0x1]
    %v581 = vld [vmem:[#allocation5 + $0x74] sm:$0x1]
    %v582 = vlaneseq
    %v583 = vshrl.u32 %v582, 7
    %v584 = vsub.s32 0, %v583
    %v585 = vrot.slane %v580, %v584
    %v587 = vsel %vm551, %v577, 0
    %v590 = vsel %vm551, %v578, 0
    %vm592 = vcmask 1043456
    %v594 = vsel %vm592, %v579, 0
    %596 = vmatprep.subr.mxu0 0.0
    %597 = vmatpush1.msra.mxu0 %v594
    %598 = vmatprep.subr.mxu0 0.0
    %599 = vmatpush1.msra.mxu0 0.0
    %600 = vmatprep.subr.mxu0 0.0
    %601 = vmatpush1.msra.mxu0 0.0
    %602 = vmatprep.subr.mxu0 0.0
    %603 = vmatpush1.msra.mxu0 0.0
    %604 = vmatprep.subr.mxu0 0.0
    %605 = vmatpush1.msra.mxu0 0.0
    %606 = vmatprep.subr.mxu0 0.0
    %607 = vmatpush1.msra.mxu0 0.0
    %608 = vmatprep.subr.mxu0 0.0
    %609 = vmatpush1.msra.mxu0 0.0
    %610 = vmatprep.subr.mxu0 0.0
    %611 = vmatpush1.msra.mxu0 0.0
    %612 = vmatprep.subr.mxu0 0.0
    %613 = vmatpush1.msra.mxu0 0.0
    %614 = vmatprep.subr.mxu0 0.0
    %615 = vmatpush1.msra.mxu0 0.0
    %616 = vmatprep.subr.mxu0 0.0
    %617 = vmatpush1.msra.mxu0 0.0
    %618 = vmatprep.subr.mxu0 0.0
    %619 = vmatpush1.msra.mxu0 0.0
    %620 = vmatprep.subr.mxu0 0.0
    %621 = vmatpush1.msra.mxu0 0.0
    %622 = vmatprep.subr.mxu0 0.0
    %623 = vmatpush1.msra.mxu0 0.0
    %624 = vmatprep.subr.mxu0 0.0
    %625 = vmatpush1.msra.mxu0 0.0
    %626 = vmatprep.subr.mxu0 0.0
    %627 = vmatpush1.msra.mxu0 0.0
    %628 = vmatprep.subr.mxu0 0.0
    %629 = vmatpush1.msra.mxu0 0.0
    %630 = vmatprep.subr.mxu0 0.0
    %631 = vmatpush1.msra.mxu0 0.0
    %632 = vmatprep.subr.mxu0 0.0
    %633 = vmatpush1.msra.mxu0 0.0
    %634 = vmatprep.subr.mxu0 0.0
    %635 = vmatpush1.msra.mxu0 0.0
    %636 = vmatprep.subr.mxu0 0.0
    %637 = vmatpush1.msra.mxu0 0.0
    %638 = vmatprep.subr.mxu0 0.0
    %639 = vmatpush1.msra.mxu0 0.0
    %640 = vmatprep.subr.mxu0 0.0
    %641 = vmatpush1.msra.mxu0 0.0
    %642 = vmatprep.subr.mxu0 0.0
    %643 = vmatpush1.msra.mxu0 0.0
    %644 = vmatprep.subr.mxu0 0.0
    %645 = vmatpush1.msra.mxu0 0.0
    %646 = vmatprep.subr.mxu0 0.0
    %647 = vmatpush1.msra.mxu0 0.0
    %648 = vmatprep.subr.mxu0 0.0
    %649 = vmatpush1.msra.mxu0 0.0
    %650 = vmatprep.subr.mxu0 0.0
    %651 = vmatpush1.msra.mxu0 0.0
    %652 = vmatprep.subr.mxu0 0.0
    %653 = vmatpush1.msra.mxu0 0.0
    %654 = vmatprep.subr.mxu0 0.0
    %655 = vmatpush1.msra.mxu0 0.0
    %656 = vmatprep.subr.mxu0 0.0
    %657 = vmatpush1.msra.mxu0 0.0
    %658 = vmatprep.subr.mxu0 0.0
    %659 = vmatpush1.msra.mxu0 0.0
    %660 = vmatprep.mubr.f32.mxu0 0.0
    %661 = vmatmul.mubr.f32.gmra.mrb[0].mxu0 %v587
    %v662 = vpop.f32.mrb[0].mxu0
    %v663 = vadd.f32 %v585, %v662
    %v664 = vpop.f32.mrb[0].mxu0
    %665 = vmatprep.mubr.f32.mxu0 0.0
    %666 = vmatmul.mubr.f32.gmra.mrb[0].mxu0 %v590
    %v667 = vpop.f32.mrb[0].mxu0
    %v668 = vadd.f32 %v585, %v667
    %v669 = vpop.f32.mrb[0].mxu0
    %670 = vdwg.mxu0
    %vm671 = vcmp.ge.f32.partialorder %v663, 0.0
    %vm672 = vcmp.ge.f32.partialorder %v668, 0.0
    %v673 = vlaneseq
    %v674 = vshrl.u32 %v673, 7
    %v675 = vsub.s32 0, %v674
    %v676 = vrot.slane %v581, %v675
    %v677 = vmul.f32 %v676, %v663
    %v678 = vmul.f32 %v676, %v668
    %v679 = vsel %vm671, %v663, %v677
    %v680 = vsel %vm672, %v668, %v678
    %vm681 = vcmask 15360
    %v682 = vsel %vm681, %v679, 0.0
    %683 = vadd.xlane.f32.xlu0 %v682
    %v684 = vpop.xlane.xlu0 %683
    %v685 = vsel %vm681, %v680, 0.0
    %686 = vadd.xlane.f32.xlu0 %v685
    %v687 = vpop.xlane.xlu0 %686
    %v688 = vrcp.pop 2.0
    %v689 = vmul.f32 %v684, %v688
    %v690 = vmul.f32 %v687, %v688
    %v691 = vsub.f32 %v679, %v689
    %v692 = vsub.f32 %v680, %v690
    %v693 = vmul.f32 %v691, %v691
    %v694 = vmul.f32 %v692, %v692
    %v695 = vsel %vm681, %v693, 0.0
    %696 = vadd.xlane.f32.xlu0 %v695
    %v697 = vpop.xlane.xlu0 %696
    %v698 = vsel %vm681, %v694, 0.0
    %699 = vadd.xlane.f32.xlu0 %v698
    %v700 = vpop.xlane.xlu0 %699
    %v701 = vmul.f32 %v697, %v688
    %v702 = vmul.f32 %v700, %v688
    %v703 = vadd.f32 %v701, 1e-05
    %v704 = vadd.f32 %v702, 1e-05
    %v705 = vrsqrt.pop %v703
    %v706 = vrsqrt.pop %v704
    %v707 = vmul.f32 %v691, %v705
    %v708 = vmul.f32 %v692, %v706
    %v709 = vsel %vm681, %v707, 0.0
    %v710 = vrot.slane %v709, 4
    %v711 = vadd.f32 %v709, %v710
    %v712 = vrot.slane %v711, 2
    %v713 = vadd.f32 %v711, %v712
    %v714 = vrot.slane %v713, 1
    %v715 = vadd.f32 %v713, %v714
    %v716 = vsel %vm681, %v708, 0.0
    %v717 = vrot.slane %v716, 4
    %v718 = vadd.f32 %v716, %v717
    %v719 = vrot.slane %v718, 2
    %v720 = vadd.f32 %v718, %v719
    %v721 = vrot.slane %v720, 1
    %v722 = vadd.f32 %v720, %v721
    %v723 = vmul.f32 %v715, %v432
    %v724 = vmul.f32 %v722, %v432
    %v725 = vld [vmem:[#allocation5 + $0x60] sm:$0x1]
    %v726 = vld [vmem:[#allocation5 + $0x6d] sm:$0x1]
    %v727 = vlaneseq
    %v728 = vshrl.u32 %v727, 7
    %v729 = vsub.s32 0, %v728
    %v730 = vrot.slane %v725, %v729
    %v731 = vmul.f32 %v723, %v730
    %v732 = vmul.f32 %v724, %v730
    %v735 = vrot.slane %v732, 7
    %vm736 = vcmask 1041409
    %v737 = vsel %vm736, %v735, %v731
    %vm739 = vcmask 9216
    %v740 = vsel %vm739, %v737, 0.0
    %741 = vadd.xlane.f32.xlu0 %v740
    %v742 = vpop.xlane.xlu0 %741
    %s743 = vtos %v726
    %v744 = vstv %s743
    %v745 = vadd.f32 %v742, %v744
    %v747 = vlaneseq
    %v748 = vand.u32 %v747, 127
    %v749 = vlaneseq
    %v750 = vshrl.u32 %v749, 7
    %v751 = vsub.s32 %v748, %v750
    %v752 = vrot.slane %v745, %v751
    %vm754 = vcmask 8192
    %755 = vst.msk [vmem:[#allocation7] sm:$0x1] %vm754, %v752
    // Predicated region
    $region18: #{forward.1} parent=1 // pred_check
      _
    $region19: #{forward.1} parent=1 // pred_check_branch
      %757 = sbr.rel (0) target = $region21
    $region20: #{forward.1} parent=1 // pred_region
      %s759 = ssub.s32 16, 16
      %760 = vsyncadd [#allocation4], %s759
      %s762 = sshll.u32 [#allocation7], 4
      %s763 = int_to_ptr.vmem [resolvable:$true] %s762
      %765 = dma.vmem_to_hbm [thread:$0]  %s763, 16, %s2, [#allocation4]
    $region21: #{forward.1} parent=1 // pred_fallthru
      _
    // Predicated region
    $region22: #{forward.1} parent=1 // pred_check
      _
    $region23: #{forward.1} parent=1 // pred_check_branch
      %767 = sbr.rel (0) target = $region25
    $region24: #{forward.1} parent=1 // pred_region
      %768 = dma.done [#allocation4], 16
    $region25: #{forward.1} parent=1 // pred_fallthru
      _
    %769 = vsyncpa [#allocation3], 1
    %770 = vsyncpa [#allocation6], 1
    %771 = vsyncpa [#allocation4], 1

</llo_original>
